<compile_context>
chip_gen: v7x
topology: tpu7x:2x2x1
jax: 0.10.0
libtpu: 0.0.40
codegen_flags: <defaults>
</compile_context>

<pallas_src>
import functools
import math

import jax
import jax.numpy as jnp
from jax.experimental import pallas as pl
from jax.experimental.pallas import tpu as pltpu


def _pick_tile(n, preferred, align):
    """Largest usable tile for an axis of extent `n`: the full extent if it is
    already small, otherwise the largest divisor of n that is <= preferred and
    `align`-aligned (fallback: full extent, which Pallas always accepts)."""
    if n <= preferred:
        return n
    for cand in range(preferred, 0, -1):
        if n % cand == 0 and cand % align == 0:
            return cand
    return n  # no aligned divisor -> single full-extent block (correct, untiled)


# ---------------------------------------------------------------------------
# 1) Tiled linear (matmul + bias) kernel
# ---------------------------------------------------------------------------
def _linear_kernel(x_ref, w_ref, b_ref, o_ref, acc_ref, *, mxu_dtype):
    @pl.when(pl.program_id(2) == 0)
    def _init():
        acc_ref[...] = jnp.zeros_like(acc_ref)

    x = x_ref[...]
    w = w_ref[...]
    if mxu_dtype is not None:
        x = x.astype(mxu_dtype)
        w = w.astype(mxu_dtype)
    acc_ref[...] += jnp.dot(x, w, preferred_element_type=jnp.float32)

    @pl.when(pl.program_id(2) == pl.num_programs(2) - 1)
    def _store():
        o_ref[...] = (acc_ref[...] + b_ref[...]).astype(o_ref.dtype)


def pallas_linear(x, w, b, *, tm=512, tn=1024, tk=1024, mxu_dtype=None):
    """y = x @ w + b.  x:(M,K) w:(K,N) b:(1,N) -> (M,N) float32."""
    M, K = x.shape
    _, N = w.shape
    tm = _pick_tile(M, tm, 8)
    tn = _pick_tile(N, tn, 128)
    tk = _pick_tile(K, tk, 128)
    grid = (M // tm, N // tn, K // tk)
    return pl.pallas_call(
        functools.partial(_linear_kernel, mxu_dtype=mxu_dtype),
        out_shape=jax.ShapeDtypeStruct((M, N), jnp.float32),
        grid=grid,
        in_specs=[
            pl.BlockSpec((tm, tk), lambda i, j, kk: (i, kk)),
            pl.BlockSpec((tk, tn), lambda i, j, kk: (kk, j)),
            pl.BlockSpec((1, tn), lambda i, j, kk: (0, j)),
        ],
        out_specs=pl.BlockSpec((tm, tn), lambda i, j, kk: (i, j)),
        scratch_shapes=[pltpu.VMEM((tm, tn), jnp.float32)],
        compiler_params=pltpu.CompilerParams(
            dimension_semantics=("parallel", "parallel", "arbitrary")),
    )(x, w, b)


# ---------------------------------------------------------------------------
# 2) Fused relative-position attention: bd matmul + rel_shift + softmax + PV
# ---------------------------------------------------------------------------
def _rel_shift_rows(bd, shift_amt, seq_len):
    """bd: (Tq, 2T-1).  Returns (Tq, T) with out[r, j] = bd[r, j + shift_amt[r]].

    shift_amt: (Tq, 1) int32 in [0, T-1].  Implemented as a static log2(T)-step
    conditional ("barrel") shifter using only static slices / concats / selects,
    so the per-row gather never leaves VMEM and lowers on all TPU generations.
    """
    tq = bd.shape[0]
    width = 2 * seq_len                       # pad the odd 2T-1 axis to 2T
    x = jnp.concatenate(
        [bd, jnp.zeros((tq, width - bd.shape[1]), bd.dtype)], axis=-1)
    for bit in range((seq_len - 1).bit_length()):
        amt = 1 << bit
        shifted = jnp.concatenate(
            [x[:, amt:], jnp.zeros((tq, amt), bd.dtype)], axis=-1)
        x = jnp.where((shift_amt & amt) != 0, shifted, x)
    return x[:, :seq_len]


def _rel_attn_kernel(q_ref, k_ref, v_ref, p_ref, bu_ref, bv_ref, o_ref, *,
                     n_head, d_k, q_tile, seq_len, scale, mxu_dtype):
    cast = (lambda t: t.astype(mxu_dtype)) if mxu_dtype is not None else (lambda t: t)

    t0 = pl.program_id(1) * q_tile            # absolute query-row offset of tile
    q = q_ref[0]                              # (Tq, C)   heads packed in lane dim
    k = k_ref[0]                              # (T,  C)
    v = v_ref[0]                              # (T,  C)
    p = p_ref[0]                              # (2T-1, C)
    bu = bu_ref[...]                          # (H, d_k)
    bv = bv_ref[...]                          # (H, d_k)

    row = jax.lax.broadcasted_iota(jnp.int32, (q_tile, 1), 0)
    shift_amt = (seq_len - 1 - t0) - row      # (Tq, 1), values in [0, T-1]

    ctx_heads = []
    for h in range(n_head):                   # small static head loop
        sl = slice(h * d_k, (h + 1) * d_k)
        qh, kh, vh, ph = q[:, sl], k[:, sl], v[:, sl], p[:, sl]

        # pre-scale q once -> no (Tq, T) multiply on the scores
        qu = (qh + bu[h:h + 1, :]) * scale
        qv = (qh + bv[h:h + 1, :]) * scale

        ac = jax.lax.dot_general(cast(qu), cast(kh), (((1,), (1,)), ((), ())),
                                 preferred_element_type=jnp.float32)  # (Tq, T)
        bd = jax.lax.dot_general(cast(qv), cast(ph), (((1,), (1,)), ((), ())),
                                 preferred_element_type=jnp.float32)  # (Tq, 2T-1)

        s = ac + _rel_shift_rows(bd, shift_amt, seq_len)               # (Tq, T)
        m = jnp.max(s, axis=-1, keepdims=True)
        e = jnp.exp(s - m)
        denom = jnp.sum(e, axis=-1, keepdims=True)

        # normalize after PV: division moves from (Tq, T) to (Tq, d_k)
        ctx = jnp.dot(cast(e), cast(vh), preferred_element_type=jnp.float32)
        r = pl.reciprocal(denom, approx=True)
        r = r * (2.0 - denom * r)             # one Newton step (cheap, (Tq,1))
        ctx_heads.append(ctx * r)

    # single lane-dense (Tq, C) store
    o_ref[0] = jnp.concatenate(ctx_heads, axis=-1).astype(o_ref.dtype)


def _fused_rel_attention(q, k, v, p, pos_bias_u, pos_bias_v, *, n_head, scale,
                         q_tile=256, mxu_dtype=None):
    """q/k/v: (B, T, C); p: (B, 2T-1, C); biases: (H, d_k) -> (B, T, C)."""
    B, T, C = q.shape
    P = p.shape[1]
    d_k = C // n_head
    tq = _pick_tile(T, q_tile, 8)
    nq = T // tq

    kernel = functools.partial(
        _rel_attn_kernel, n_head=n_head, d_k=d_k, q_tile=tq, seq_len=T,
        scale=scale, mxu_dtype=mxu_dtype)

    return pl.pallas_call(
        kernel,
        out_shape=jax.ShapeDtypeStruct((B, T, C), jnp.float32),
        grid=(B, nq),
        in_specs=[
            pl.BlockSpec((1, tq, C), lambda b, i: (b, i, 0)),   # q tile
            pl.BlockSpec((1, T, C), lambda b, i: (b, 0, 0)),    # k (kept across i)
            pl.BlockSpec((1, T, C), lambda b, i: (b, 0, 0)),    # v
            pl.BlockSpec((1, P, C), lambda b, i: (b, 0, 0)),    # p
            pl.BlockSpec((n_head, d_k), lambda b, i: (0, 0)),   # pos_bias_u
            pl.BlockSpec((n_head, d_k), lambda b, i: (0, 0)),   # pos_bias_v
        ],
        out_specs=pl.BlockSpec((1, tq, C), lambda b, i: (b, i, 0)),
        compiler_params=pltpu.CompilerParams(
            dimension_semantics=("parallel", "parallel"),
            vmem_limit_bytes=64 * 1024 * 1024),
    )(q, k, v, p, pos_bias_u, pos_bias_v)


# ---------------------------------------------------------------------------
# Full module forward (matches RelPositionMultiHeadedAttention.forward)
# ---------------------------------------------------------------------------
def rel_position_mha(params, query, key, value, pos_emb, n_head, *,
                     q_tile=256, mxu_dtype=None):
    """query/key/value: (T, B, C); pos_emb: (2T-1, B, C). Returns ((T,B,C), None)."""
    T, B, C = query.shape
    P = pos_emb.shape[0]
    h = n_head
    d_k = C // h
    scale = 1.0 / math.sqrt(d_k)

    # The module's own (T,B,C)->(B,T,C) layout change; everything downstream stays
    # in (B, T, C) with heads packed into the lane dimension (no head transposes).
    q_in = jnp.transpose(query, (1, 0, 2)).reshape(B * T, C)
    k_in = jnp.transpose(key, (1, 0, 2)).reshape(B * T, C)
    v_in = jnp.transpose(value, (1, 0, 2)).reshape(B * T, C)
    p_in = jnp.transpose(pos_emb, (1, 0, 2)).reshape(B * P, C)

    zero_b = jnp.zeros((1, C), jnp.float32)                  # linear_pos has no bias
    q = pallas_linear(q_in, params["wq"], params["bq"], mxu_dtype=mxu_dtype).reshape(B, T, C)
    k = pallas_linear(k_in, params["wk"], params["bk"], mxu_dtype=mxu_dtype).reshape(B, T, C)
    v = pallas_linear(v_in, params["wv"], params["bv"], mxu_dtype=mxu_dtype).reshape(B, T, C)
    p = pallas_linear(p_in, params["wpos"], zero_b, mxu_dtype=mxu_dtype).reshape(B, P, C)

    ctx = _fused_rel_attention(q, k, v, p,
                               params["pos_bias_u"], params["pos_bias_v"],
                               n_head=h, scale=scale, q_tile=q_tile,
                               mxu_dtype=mxu_dtype)          # (B, T, C) lane-dense

    out = pallas_linear(ctx.reshape(B * T, C), params["wout"], params["bout"],
                        mxu_dtype=mxu_dtype).reshape(B, T, C)
    return jnp.transpose(out, (1, 0, 2)), None


# ---------------------------------------------------------------------------
# Pure-JAX reference (mirrors the PyTorch module; rel_shift via explicit gather
# so it independently cross-checks the in-kernel shifter)
# ---------------------------------------------------------------------------
def reference_forward(params, query, key, value, pos_emb, n_head):
    T, B, C = query.shape
    h = n_head
    d_k = C // h
    prec = jax.lax.Precision.HIGHEST

    def lin(x, w, b=None):
        y = jnp.einsum("btc,cd->btd", x, w, precision=prec)
        return y if b is None else y + b

    q_in = jnp.transpose(query, (1, 0, 2))
    k_in = jnp.transpose(key, (1, 0, 2))
    v_in = jnp.transpose(value, (1, 0, 2))
    pe = jnp.transpose(pos_emb, (1, 0, 2))

    q = lin(q_in, params["wq"], params["bq"]).reshape(B, T, h, d_k)
    k = lin(k_in, params["wk"], params["bk"]).reshape(B, -1, h, d_k).transpose(0, 2, 1, 3)
    v = lin(v_in, params["wv"], params["bv"]).reshape(B, -1, h, d_k).transpose(0, 2, 1, 3)
    p = lin(pe, params["wpos"]).reshape(B, -1, h, d_k).transpose(0, 2, 1, 3)

    q_u = (q + params["pos_bias_u"]).transpose(0, 2, 1, 3)
    q_v = (q + params["pos_bias_v"]).transpose(0, 2, 1, 3)

    ac = jnp.einsum("bhtd,bhsd->bhts", q_u, k, precision=prec)
    bd = jnp.einsum("bhtd,bhpd->bhtp", q_v, p, precision=prec)

    i = jnp.arange(T)[:, None]
    j = jnp.arange(T)[None, :]
    idx = j - i + (T - 1)                                    # rel_shift as a gather
    bd_s = jnp.take_along_axis(bd, jnp.broadcast_to(idx, (B, h, T, T)), axis=-1)

    scores = (ac + bd_s) / math.sqrt(d_k)
    attn = jax.nn.softmax(scores, axis=-1)
    ctx = jnp.einsum("bhts,bhsd->bhtd", attn, v, precision=prec)
    ctx = ctx.transpose(0, 2, 1, 3).reshape(B, T, h * d_k)
    out = lin(ctx, params["wout"], params["bout"])
    return jnp.transpose(out, (1, 0, 2))


if __name__ == "__main__":
    T, B, C, H = 8, 2, 32, 4
    d_k = C // H
    P = 2 * T - 1

    root = jax.random.PRNGKey(0)
    ks = jax.random.split(root, 14)
    w_scale = 1.0 / math.sqrt(C)

    params = dict(
        wq=jax.random.normal(ks[0], (C, C), jnp.float32) * w_scale,
        bq=jax.random.normal(ks[1], (1, C), jnp.float32) * 0.02,
        wk=jax.random.normal(ks[2], (C, C), jnp.float32) * w_scale,
        bk=jax.random.normal(ks[3], (1, C), jnp.float32) * 0.02,
        wv=jax.random.normal(ks[4], (C, C), jnp.float32) * w_scale,
        bv=jax.random.normal(ks[5], (1, C), jnp.float32) * 0.02,
        wpos=jax.random.normal(ks[6], (C, C), jnp.float32) * w_scale,
        wout=jax.random.normal(ks[7], (C, C), jnp.float32) * w_scale,
        bout=jax.random.normal(ks[8], (1, C), jnp.float32) * 0.02,
        pos_bias_u=jax.random.normal(ks[9], (H, d_k), jnp.float32) * 0.1,
        pos_bias_v=jax.random.normal(ks[10], (H, d_k), jnp.float32) * 0.1,
    )

    x = jax.random.normal(ks[11], (T, B, C), jnp.float32)         # query=key=value
    pos_emb = jax.random.normal(ks[12], (P, B, C), jnp.float32)   # (2T-1, B, C)

    out, _ = rel_position_mha(params, x, x, x, pos_emb, H)
    out = jax.block_until_ready(out)

    ref = reference_forward(params, x, x, x, pos_emb, H)
    assert out.shape == (T, B, C)
    err = float(jnp.max(jnp.abs(out - ref)))
    assert jnp.allclose(out, ref, atol=2e-3, rtol=2e-3), f"max abs err {err}"

    print("KERNEL_OK")
</pallas_src>

<mosaic_0001>
module attributes {stable_mosaic.version = 11 : i64} {
  func.func @_linear_kernel(%arg0: i32, %arg1: i32, %arg2: i32, %arg3: memref<16x32xf32, #tpu.memory_space<vmem>>, %arg4: memref<32x32xf32, #tpu.memory_space<vmem>>, %arg5: memref<1x32xf32, #tpu.memory_space<vmem>>, %arg6: memref<16x32xf32, #tpu.memory_space<vmem>>, %arg7: memref<16x32xf32, #tpu.memory_space<vmem>>) attributes {dimension_semantics = [#tpu.dimension_semantics<parallel>, #tpu.dimension_semantics<parallel>, #tpu.dimension_semantics<arbitrary>], iteration_bounds = array<i64: 1, 1, 1>, scalar_prefetch = 0 : i64, scratch_operands = 1 : i64, tpu.core_type = #tpu.core_type<tc>, window_params = [{transform_indices = @transform_0, window_bounds = array<i64: 16, 32>}, {transform_indices = @transform_1, window_bounds = array<i64: 32, 32>}, {transform_indices = @transform_2, window_bounds = array<i64: 1, 32>}, {transform_indices = @transform_3, window_bounds = array<i64: 16, 32>}]} {
    %c0_i32 = arith.constant 0 : i32
    %0 = arith.cmpi eq, %arg2, %c0_i32 : i32
    %1 = arith.extui %0 : i1 to i32
    %c0_i32_0 = arith.constant 0 : i32
    %2 = arith.cmpi ne, %1, %c0_i32_0 : i32
    scf.if %2 {
      %cst_10 = arith.constant 0.000000e+00 : f32
      %12 = vector.broadcast %cst_10 : f32 to vector<16x32xf32>
      %c0_11 = arith.constant 0 : index
      %c0_12 = arith.constant 0 : index
      %13 = vector.load %arg7[%c0_11, %c0_12] : memref<16x32xf32, #tpu.memory_space<vmem>>, vector<16x32xf32>
      tpu.vector_store %arg7[%c0_11, %c0_12], %12 {strides = array<i32>} : memref<16x32xf32, #tpu.memory_space<vmem>>, vector<16x32xf32>,
    } else {
    }
    %c0 = arith.constant 0 : index
    %c0_1 = arith.constant 0 : index
    %3 = vector.load %arg3[%c0, %c0_1] : memref<16x32xf32, #tpu.memory_space<vmem>>, vector<16x32xf32>
    %c0_2 = arith.constant 0 : index
    %c0_3 = arith.constant 0 : index
    %4 = vector.load %arg4[%c0_2, %c0_3] : memref<32x32xf32, #tpu.memory_space<vmem>>, vector<32x32xf32>
    %c0_4 = arith.constant 0 : index
    %c0_5 = arith.constant 0 : index
    %5 = vector.load %arg7[%c0_4, %c0_5] : memref<16x32xf32, #tpu.memory_space<vmem>>, vector<16x32xf32>
    %cst = arith.constant dense<0.000000e+00> : vector<16x32xf32>
    %6 = tpu.matmul %3, %4, %cst {dimension_numbers = #tpu.dot_dimension_numbers<[1], [0], [0], [1], [0, 0, 1, 1], [], []>} : vector<16x32xf32>, vector<32x32xf32>, vector<16x32xf32> -> vector<16x32xf32>
    %7 = arith.addf %5, %6 : vector<16x32xf32>
    %c0_6 = arith.constant 0 : index
    %c0_7 = arith.constant 0 : index
    %8 = vector.load %arg7[%c0_6, %c0_7] : memref<16x32xf32, #tpu.memory_space<vmem>>, vector<16x32xf32>
    tpu.vector_store %arg7[%c0_6, %c0_7], %7 {strides = array<i32>} : memref<16x32xf32, #tpu.memory_space<vmem>>, vector<16x32xf32>,
    %c0_i32_8 = arith.constant 0 : i32
    %9 = arith.cmpi eq, %arg2, %c0_i32_8 : i32
    %10 = arith.extui %9 : i1 to i32
    %c0_i32_9 = arith.constant 0 : i32
    %11 = arith.cmpi ne, %10, %c0_i32_9 : i32
    scf.if %11 {
      %c0_10 = arith.constant 0 : index
      %c0_11 = arith.constant 0 : index
      %12 = vector.load %arg7[%c0_10, %c0_11] : memref<16x32xf32, #tpu.memory_space<vmem>>, vector<16x32xf32>
      %c0_12 = arith.constant 0 : index
      %c0_13 = arith.constant 0 : index
      %13 = vector.load %arg5[%c0_12, %c0_13] : memref<1x32xf32, #tpu.memory_space<vmem>>, vector<1x32xf32>
      %14 = vector.broadcast %13 : vector<1x32xf32> to vector<16x32xf32>
      %15 = arith.addf %12, %14 : vector<16x32xf32>
      %c0_14 = arith.constant 0 : index
      %c0_15 = arith.constant 0 : index
      %16 = vector.load %arg6[%c0_14, %c0_15] : memref<16x32xf32, #tpu.memory_space<vmem>>, vector<16x32xf32>
      tpu.vector_store %arg6[%c0_14, %c0_15], %15 {strides = array<i32>} : memref<16x32xf32, #tpu.memory_space<vmem>>, vector<16x32xf32>,
    } else {
    }
    return
  }
  func.func @transform_0(%arg0: i32, %arg1: i32, %arg2: i32) -> (i32, i32) {
    %c0_i32 = arith.constant 0 : i32
    return %arg0, %arg2 : i32, i32
  }
  func.func @transform_1(%arg0: i32, %arg1: i32, %arg2: i32) -> (i32, i32) {
    %c0_i32 = arith.constant 0 : i32
    return %arg2, %arg1 : i32, i32
  }
  func.func @transform_2(%arg0: i32, %arg1: i32, %arg2: i32) -> (i32, i32) {
    %c0_i32 = arith.constant 0 : i32
    %c0_i32_0 = arith.constant 0 : i32
    return %c0_i32, %arg1 : i32, i32
  }
  func.func @transform_3(%arg0: i32, %arg1: i32, %arg2: i32) -> (i32, i32) {
    %c0_i32 = arith.constant 0 : i32
    return %arg0, %arg1 : i32, i32
  }
}

</mosaic_0001>

<llo_original>
// kernel: tpu_custom_call.1
$region0: #{tpu_custom_call.1}
  #allocation0 [shape = 'u32[]', space=smem, size = 0x4, offset = 0x4, fixed_abs, tag = 'smem constant byte address 0x4 - core index']
  #allocation1 [shape = 'u32[144,128]{1,0:T(1,128)}', space=vmem, size = 0x12000, scoped, tag = 'internal scratch']
  #allocation2 [shape = 'f32[16,32]{1,0:T(8,128)}', space=vmem, size = 0x2000, scoped, tag = 'scratch operand']
  %s0 = inlined_call_operand.hbm [shape: f32[16,32], index: 0, kind: input, shape index: {}]
  %s1 = inlined_call_operand.hbm [shape: f32[32,32], index: 1, kind: input, shape index: {}]
  %s2 = inlined_call_operand.vmem [shape: f32[1,32], index: 2, kind: input, shape index: {}]
  %s3 = inlined_call_operand.hbm [shape: f32[16,32], index: 3, kind: output, shape index: {}]
  %s4 = sld [smem:[#allocation0]]
  $region38: #{tpu_custom_call.1} parent=0
    _
  %s6 = ssub.s32 1, %s4
  %s7 = scalar_select 0, %s6, %s4
  $region1: #{tpu_custom_call.1} parent=0
    #allocation3 [shape = 'u8[8192]{0}', space=vmem, size = 0x2000, scoped, tag = 'input window, operand 0, single buffered']
    #allocation4 [shape = 's32[1]{0}', space=sflag, size = 0x4, scoped, tag = 'scoped memory for tpu_custom_call.1']
    #allocation5 [shape = 's32[1]{0}', space=sflag, size = 0x4, scoped, tag = 'scoped memory for tpu_custom_call.1']
    #allocation6 [shape = 'u8[16384]{0}', space=vmem, size = 0x4000, scoped, tag = 'input window, operand 1, single buffered']
    #allocation7 [shape = 's32[1]{0}', space=sflag, size = 0x4, scoped, tag = 'scoped memory for tpu_custom_call.1']
    #allocation8 [shape = 'u8[8192]{0}', space=vmem, size = 0x2000, scoped, tag = 'output window, operand 0, single buffered']
    %8 = vsyncpa [#allocation4], 0
    %9 = vsyncpa [#allocation7], 0
    %10 = vsyncpa [#allocation5], 0
    // Predicated region
    $region2: #{tpu_custom_call.1} parent=1 // pred_check
      _
    $region3: #{tpu_custom_call.1} parent=1 // pred_check_branch
      %12 = sbr.rel (0) target = $region5
    $region4: #{tpu_custom_call.1} parent=1 // pred_region
      %s14 = ssub.s32 256, 256
      %15 = vsyncadd [#allocation4], %s14
      %s16 = sshll.u32 [#allocation3], 4
      %s17 = int_to_ptr.vmem [resolvable:$true] %s16
      %22 = dma.hbm_to_vmem [thread:$0]  %s0, 256, %s17, [#allocation4], 128, 128, 8
    $region5: #{tpu_custom_call.1} parent=1 // pred_fallthru
      _
    // Predicated region
    $region6: #{tpu_custom_call.1} parent=1 // pred_check
      _
    $region7: #{tpu_custom_call.1} parent=1 // pred_check_branch
      %24 = sbr.rel (0) target = $region9
    $region8: #{tpu_custom_call.1} parent=1 // pred_region
      %s26 = ssub.s32 512, 512
      %27 = vsyncadd [#allocation7], %s26
      %s28 = sshll.u32 [#allocation6], 4
      %s29 = int_to_ptr.vmem [resolvable:$true] %s28
      %34 = dma.hbm_to_vmem [thread:$0]  %s1, 512, %s29, [#allocation7], 128, 128, 8
    $region9: #{tpu_custom_call.1} parent=1 // pred_fallthru
      _
    // Predicated region
    $region10: #{tpu_custom_call.1} parent=1 // pred_check
      _
    $region11: #{tpu_custom_call.1} parent=1 // pred_check_branch
      %36 = sbr.rel (0) target = $region13
    $region12: #{tpu_custom_call.1} parent=1 // pred_region
      _
    $region13: #{tpu_custom_call.1} parent=1 // pred_fallthru
      _
    // Predicated region
    $region14: #{tpu_custom_call.1} parent=1 // pred_check
      _
    $region15: #{tpu_custom_call.1} parent=1 // pred_check_branch
      %38 = sbr.rel (0) target = $region17
    $region16: #{tpu_custom_call.1} parent=1 // pred_region
      %39 = dma.done [#allocation4], 256
    $region17: #{tpu_custom_call.1} parent=1 // pred_fallthru
      _
    // Predicated region
    $region18: #{tpu_custom_call.1} parent=1 // pred_check
      _
    $region19: #{tpu_custom_call.1} parent=1 // pred_check_branch
      %41 = sbr.rel (0) target = $region21
    $region20: #{tpu_custom_call.1} parent=1 // pred_region
      %42 = dma.done [#allocation7], 512
    $region21: #{tpu_custom_call.1} parent=1 // pred_fallthru
      _
    %p43 = scmp.eq.s32.totalorder 0, 0
    // Predicated region
    $region22: #{tpu_custom_call.1} parent=1 // pred_check
      %p44 = pneg %p43
    $region23: #{tpu_custom_call.1} parent=1 // pred_check_branch
      %46 = sbr.rel (%p44) target = $region25
    $region24: #{tpu_custom_call.1} parent=1 // pred_region
      %vm47 = vcmask 261120
      %48 = vst.msk [vmem:[#allocation2] sm:$0xff] %vm47, 0.0
      %49 = vst.msk [vmem:[#allocation2 + $0x8] sm:$0xff] %vm47, 0.0
    $region25: #{tpu_custom_call.1} parent=1 // pred_fallthru
      _
    %v50 = vld [vmem:[#allocation3] sm:$0xff]
    %v51 = vld [vmem:[#allocation3 + $0x8] sm:$0xff]
    %v52 = vld [vmem:[#allocation6] sm:$0xff]
    %v53 = vld [vmem:[#allocation6 + $0x8] sm:$0xff]
    %v54 = vld [vmem:[#allocation6 + $0x10] sm:$0xff]
    %v55 = vld [vmem:[#allocation6 + $0x18] sm:$0xff]
    %v56 = vld [vmem:[#allocation2] sm:$0xff]
    %v57 = vld [vmem:[#allocation2 + $0x8] sm:$0xff]
    %vm58 = vcmask 261120
    %v60 = vsel %vm58, %v50, 0
    %v63 = vsel %vm58, %v51, 0
    %65 = vmatprep.subr.mxu0 0.0
    %66 = vmatpush1.msra.mxu0 %v52
    %67 = vmatprep.subr.mxu0 0.0
    %68 = vmatpush1.msra.mxu0 %v53
    %69 = vmatprep.subr.mxu0 0.0
    %70 = vmatpush1.msra.mxu0 %v54
    %71 = vmatprep.subr.mxu0 0.0
    %72 = vmatpush1.msra.mxu0 %v55
    %73 = vmatprep.subr.mxu0 0.0
    %74 = vmatpush1.msra.mxu0 0.0
    %75 = vmatprep.subr.mxu0 0.0
    %76 = vmatpush1.msra.mxu0 0.0
    %77 = vmatprep.subr.mxu0 0.0
    %78 = vmatpush1.msra.mxu0 0.0
    %79 = vmatprep.subr.mxu0 0.0
    %80 = vmatpush1.msra.mxu0 0.0
    %81 = vmatprep.subr.mxu0 0.0
    %82 = vmatpush1.msra.mxu0 0.0
    %83 = vmatprep.subr.mxu0 0.0
    %84 = vmatpush1.msra.mxu0 0.0
    %85 = vmatprep.subr.mxu0 0.0
    %86 = vmatpush1.msra.mxu0 0.0
    %87 = vmatprep.subr.mxu0 0.0
    %88 = vmatpush1.msra.mxu0 0.0
    %89 = vmatprep.subr.mxu0 0.0
    %90 = vmatpush1.msra.mxu0 0.0
    %91 = vmatprep.subr.mxu0 0.0
    %92 = vmatpush1.msra.mxu0 0.0
    %93 = vmatprep.subr.mxu0 0.0
    %94 = vmatpush1.msra.mxu0 0.0
    %95 = vmatprep.subr.mxu0 0.0
    %96 = vmatpush1.msra.mxu0 0.0
    %97 = vmatprep.subr.mxu0 0.0
    %98 = vmatpush1.msra.mxu0 0.0
    %99 = vmatprep.subr.mxu0 0.0
    %100 = vmatpush1.msra.mxu0 0.0
    %101 = vmatprep.subr.mxu0 0.0
    %102 = vmatpush1.msra.mxu0 0.0
    %103 = vmatprep.subr.mxu0 0.0
    %104 = vmatpush1.msra.mxu0 0.0
    %105 = vmatprep.subr.mxu0 0.0
    %106 = vmatpush1.msra.mxu0 0.0
    %107 = vmatprep.subr.mxu0 0.0
    %108 = vmatpush1.msra.mxu0 0.0
    %109 = vmatprep.subr.mxu0 0.0
    %110 = vmatpush1.msra.mxu0 0.0
    %111 = vmatprep.subr.mxu0 0.0
    %112 = vmatpush1.msra.mxu0 0.0
    %113 = vmatprep.subr.mxu0 0.0
    %114 = vmatpush1.msra.mxu0 0.0
    %115 = vmatprep.subr.mxu0 0.0
    %116 = vmatpush1.msra.mxu0 0.0
    %117 = vmatprep.subr.mxu0 0.0
    %118 = vmatpush1.msra.mxu0 0.0
    %119 = vmatprep.subr.mxu0 0.0
    %120 = vmatpush1.msra.mxu0 0.0
    %121 = vmatprep.subr.mxu0 0.0
    %122 = vmatpush1.msra.mxu0 0.0
    %123 = vmatprep.subr.mxu0 0.0
    %124 = vmatpush1.msra.mxu0 0.0
    %125 = vmatprep.subr.mxu0 0.0
    %126 = vmatpush1.msra.mxu0 0.0
    %127 = vmatprep.subr.mxu0 0.0
    %128 = vmatpush1.msra.mxu0 0.0
    %129 = vmatprep.mubr.f32.mxu0 0.0
    %130 = vmatmul.mubr.f32.gmra.mrb[0].mxu0 %v60
    %v131 = vpop.f32.mrb[0].mxu0
    %v132 = vadd.f32 0.0, %v131
    %v133 = vpop.f32.mrb[0].mxu0
    %134 = vmatprep.mubr.f32.mxu0 0.0
    %135 = vmatmul.mubr.f32.gmra.mrb[0].mxu0 %v63
    %v136 = vpop.f32.mrb[0].mxu0
    %v137 = vadd.f32 0.0, %v136
    %v138 = vpop.f32.mrb[0].mxu0
    %139 = vdwg.mxu0
    %v140 = vadd.f32 %v56, %v132
    %v141 = vadd.f32 %v57, %v137
    %142 = vst.msk [vmem:[#allocation2] sm:$0xff] %vm58, %v140
    %143 = vst.msk [vmem:[#allocation2 + $0x8] sm:$0xff] %vm58, %v141
    // Predicated region
    $region26: #{tpu_custom_call.1} parent=1 // pred_check
      %p144 = pneg %p43
    $region27: #{tpu_custom_call.1} parent=1 // pred_check_branch
      %146 = sbr.rel (%p144) target = $region29
    $region28: #{tpu_custom_call.1} parent=1 // pred_region
      %v147 = vld [vmem:[#allocation2] sm:$0xff]
      %v148 = vld [vmem:[#allocation2 + $0x8] sm:$0xff]
      %v149 = vld [vmem:[%s2] sm:$0x1]
      %v151 = vlaneseq
      %v152 = vshrl.u32 %v151, 7
      %v153 = vsub.s32 0, %v152
      %v154 = vrot.slane %v149, %v153
      %v156 = vadd.f32 %v147, %v154
      %v157 = vadd.f32 %v148, %v154
      %158 = vst.msk [vmem:[#allocation8] sm:$0xff] %vm58, %v156
      %159 = vst.msk [vmem:[#allocation8 + $0x8] sm:$0xff] %vm58, %v157
    $region29: #{tpu_custom_call.1} parent=1 // pred_fallthru
      _
    // Predicated region
    $region30: #{tpu_custom_call.1} parent=1 // pred_check
      _
    $region31: #{tpu_custom_call.1} parent=1 // pred_check_branch
      %161 = sbr.rel (0) target = $region33
    $region32: #{tpu_custom_call.1} parent=1 // pred_region
      %s163 = ssub.s32 256, 256
      %164 = vsyncadd [#allocation5], %s163
      %s165 = sshll.u32 [#allocation8], 4
      %s166 = int_to_ptr.vmem [resolvable:$true] %s165
      %171 = dma.vmem_to_hbm [thread:$0]  %s166, 256, %s3, [#allocation5], 128, 128, 8
    $region33: #{tpu_custom_call.1} parent=1 // pred_fallthru
      _
    // Predicated region
    $region34: #{tpu_custom_call.1} parent=1 // pred_check
      _
    $region35: #{tpu_custom_call.1} parent=1 // pred_check_branch
      %173 = sbr.rel (0) target = $region37
    $region36: #{tpu_custom_call.1} parent=1 // pred_region
      %174 = dma.done [#allocation5], 256
    $region37: #{tpu_custom_call.1} parent=1 // pred_fallthru
      _
    %175 = vsyncpa [#allocation4], 1
    %176 = vsyncpa [#allocation7], 1
    %177 = vsyncpa [#allocation5], 1

</llo_original>
